<compile_context>
chip_gen: v5e
topology: v5e:2x2
jax: 0.10.0
libtpu: 0.0.40
codegen_flags: <defaults>
</compile_context>

<pallas_src>
import functools

import jax
import jax.numpy as jnp
from jax.experimental import pallas as pl
from jax.experimental.pallas import tpu as pltpu


def _round_up(a: int, b: int) -> int:
    return (a + b - 1) // b * b


def _vmem_budget():
    """(working-set budget, vmem_limit ceiling) derived from physical VMEM."""
    try:
        cap = int(pltpu.get_tpu_info().vmem_capacity_bytes)
        if cap <= 0:
            raise ValueError("bad vmem capacity")
    except Exception:
        cap = 64 << 20               # assume the smallest (v7x-like) VMEM if unknown
    budget = (cap * 11) // 20        # ~55% for tile sizing
    limit_cap = (cap * 17) // 20     # ~85% ceiling for vmem_limit_bytes
    return budget, limit_cap


# ---------------------------------------------------------------------------
# Kernels
# ---------------------------------------------------------------------------
def _fused_patch_kernel(x_ref, w_ref, bg_ref, o_ref, *, eps):
    # x_ref : (Btb, C, 1, p, W)   input row-band for Btb images (original dtype)
    # w_ref : (K, D) bf16         conv weight, K ordered (j, c, i)
    # bg_ref: (2, D) f32          row 0 = conv bias, row 1 = RMSNorm gamma
    # o_ref : (Btb, 1, Wp, D)     output block
    btb = x_ref.shape[0]
    C = x_ref.shape[1]
    p = x_ref.shape[3]
    W = x_ref.shape[4]
    Wp = W // p
    K = C * p * p
    D = o_ref.shape[-1]

    # In-VMEM patch relayout: image band -> patch rows (XLU work, MXU/HBM idle).
    xb = x_ref[...]                      # (btb, C, 1, p, W)
    xb = xb.reshape(btb, C * p, W)       # rows=(c,i), cols=w=(wp,j)
    xb = jnp.swapaxes(xb, 1, 2)          # (btb, W, C*p): rows=(wp,j), cols=(c,i)
    a = xb.reshape(btb * Wp, K)          # rows=(img,wp), cols=(j,c,i)

    y = jnp.dot(a.astype(w_ref.dtype), w_ref[...],
                preferred_element_type=jnp.float32)          # (rows, D) f32
    bg = bg_ref[...]
    y = y + bg[0:1, :]
    ms = jnp.mean(y * y, axis=-1, keepdims=True)              # true-D mean (no padding)
    y = y * jax.lax.rsqrt(ms + eps) * bg[1:2, :]
    o_ref[...] = y.reshape(btb, 1, Wp, D).astype(o_ref.dtype)


def _prepatched_kernel(a_ref, w_ref, bg_ref, o_ref, *, eps):
    # a_ref: (TM, K) bf16 patches   w_ref: (K, D) bf16   bg_ref: (2, D) f32
    y = jnp.dot(a_ref[...], w_ref[...], preferred_element_type=jnp.float32)
    bg = bg_ref[...]
    y = y + bg[0:1, :]
    ms = jnp.mean(y * y, axis=-1, keepdims=True)
    y = y * jax.lax.rsqrt(ms + eps) * bg[1:2, :]
    o_ref[...] = y.astype(o_ref.dtype)


# ---------------------------------------------------------------------------
# Tile-size selection
# ---------------------------------------------------------------------------
def _choose_btb(TB, Hp, Wp, C, p, W, D, x_bytes, out_bytes, budget):
    """Images per fused grid step: divisor of TB, fits VMEM, keeps >=2 blocks."""
    K = C * p * p
    resident = 2 * (K * D * 2) + 2 * (2 * D * 4)       # double-buffered weight + bias/gamma

    def need(b):
        x_blk = b * C * p * W * x_bytes
        o_blk = b * Wp * D * out_bytes
        interm = b * C * p * W * (2 * 4 + 2) + 2 * b * Wp * D * 4
        return resident + 2 * x_blk + 2 * o_blk + interm

    target = max(1, min(TB, pl.cdiv(256, max(Wp, 1))))  # aim for ~256 matmul rows
    divs = [d for d in range(1, TB + 1) if TB % d == 0]
    cands = [d for d in divs if d <= target] or [1]
    btb = max(cands)
    while btb > 1 and need(btb) > budget:
        smaller = [d for d in cands if d < btb]
        btb = max(smaller) if smaller else 1
    if Hp == 1 and TB >= 2 and btb >= TB:               # keep >=2 grid blocks (2-TC chips)
        smaller = [d for d in divs if d <= max(1, TB // 2)]
        btb = max(smaller) if smaller else 1
    return btb, need(btb)


def _choose_tm(M, K, D, out_bytes, budget):
    """Row tile for the pre-extracted path: multiple of 8, prefers divisors of M."""
    resident = 2 * (K * D * 2) + 2 * (2 * D * 4)

    def need(tm):
        return resident + 2 * tm * (K * 2 + D * out_bytes) + tm * D * 4

    if M <= 8:
        return M, need(M)
    cap = 1024 if budget >= (64 << 20) else 512
    tm = min(cap, _round_up(M, 8))
    if M >= 16:
        tm = min(tm, _round_up(pl.cdiv(M, 2), 8))       # >=2 blocks for 2-TC chips
    while tm > 8 and need(tm) > budget:
        tm = max(8, _round_up(tm // 2, 8))
    if tm < M:
        for d in range(tm, 7, -8):                      # divisor of M -> no uneven tail block
            if M % d == 0:
                tm = d
                break
    tm = min(tm, M)
    return tm, need(tm)


# ---------------------------------------------------------------------------
# Wrappers
# ---------------------------------------------------------------------------
def _patch_embed_fused(x, proj_w, proj_b, norm_w, patch_size, *, eps, out_dtype):
    T, B, C, H, W = x.shape
    D = proj_w.shape[0]
    p = patch_size
    Hp, Wp = H // p, W // p
    if H % p or W % p:                                  # Conv2d drops the remainder
        x = x[:, :, :, :Hp * p, :Wp * p]
        H, W = Hp * p, Wp * p
    TB, N, K = T * B, Hp * Wp, C * p * p
    out_dtype = out_dtype or x.dtype

    x5 = x.reshape(TB, C, Hp, p, W)                     # free (metadata-only) reshape
    # Weight with K ordered (j, c, i) to match the in-kernel relayout.
    wk = jnp.transpose(proj_w, (3, 1, 2, 0)).reshape(K, D).astype(jnp.bfloat16)
    bg = jnp.stack([proj_b, norm_w]).astype(jnp.float32)          # (2, D)

    budget, limit_cap = _vmem_budget()
    x_bytes = jnp.dtype(x.dtype).itemsize
    out_bytes = jnp.dtype(out_dtype).itemsize
    btb, need = _choose_btb(TB, Hp, Wp, C, p, W, D, x_bytes, out_bytes, budget)
    n_tb = pl.cdiv(TB, btb)                             # btb divides TB by construction
    vmem_limit = int(min(max(need + (8 << 20), 32 << 20), limit_cap))

    out = pl.pallas_call(
        functools.partial(_fused_patch_kernel, eps=eps),
        out_shape=jax.ShapeDtypeStruct((TB, Hp, Wp, D), out_dtype),
        grid=(n_tb, Hp),
        in_specs=[
            pl.BlockSpec((btb, C, 1, p, W), lambda g, h: (g, 0, h, 0, 0)),  # x band
            pl.BlockSpec((K, D), lambda g, h: (0, 0)),                      # weight (resident)
            pl.BlockSpec((2, D), lambda g, h: (0, 0)),                      # bias+gamma (resident)
        ],
        out_specs=pl.BlockSpec((btb, 1, Wp, D), lambda g, h: (g, h, 0, 0)),
        compiler_params=pltpu.CompilerParams(
            dimension_semantics=("parallel", "parallel"),
            vmem_limit_bytes=vmem_limit,
        ),
    )(x5, wk, bg)

    return out.reshape(T, B, N, D)


def _patch_embed_prepatched(x, proj_w, proj_b, norm_w, patch_size, *, eps, out_dtype):
    """Fallback path: XLA extracts patches (bf16), kernel fuses matmul+bias+RMSNorm."""
    T, B, C, H, W = x.shape
    D = proj_w.shape[0]
    p = patch_size
    Hp, Wp = H // p, W // p
    if H % p or W % p:
        x = x[:, :, :, :Hp * p, :Wp * p]
    TB, N, K = T * B, Hp * Wp, C * p * p
    M = TB * N
    out_dtype = out_dtype or x.dtype

    xb = x.astype(jnp.bfloat16)
    xp = xb.reshape(TB, C, Hp, p, Wp, p)
    xp = jnp.transpose(xp, (0, 2, 4, 1, 3, 5))          # (TB, Hp, Wp, C, p, p)
    patches = xp.reshape(M, K)                          # K ordered (c, i, j)

    wk = proj_w.reshape(D, K).T.astype(jnp.bfloat16)    # (K, D), same K order
    bg = jnp.stack([proj_b, norm_w]).astype(jnp.float32)

    budget, limit_cap = _vmem_budget()
    out_bytes = jnp.dtype(out_dtype).itemsize
    tm, need = _choose_tm(M, K, D, out_bytes, budget)
    vmem_limit = int(min(max(need + (8 << 20), 32 << 20), limit_cap))

    out = pl.pallas_call(
        functools.partial(_prepatched_kernel, eps=eps),
        out_shape=jax.ShapeDtypeStruct((M, D), out_dtype),
        grid=(pl.cdiv(M, tm),),
        in_specs=[
            pl.BlockSpec((tm, K), lambda i: (i, 0)),    # patches tiled over M (full-K block)
            pl.BlockSpec((K, D), lambda i: (0, 0)),     # weight (resident)
            pl.BlockSpec((2, D), lambda i: (0, 0)),     # bias+gamma (resident)
        ],
        out_specs=pl.BlockSpec((tm, D), lambda i: (i, 0)),
        compiler_params=pltpu.CompilerParams(
            dimension_semantics=("parallel",),
            vmem_limit_bytes=vmem_limit,
        ),
    )(patches, wk, bg)

    return out.reshape(T, B, N, D)


def patch_embed(x, proj_w, proj_b, norm_w, patch_size, *, eps=1e-6,
                out_dtype=None, fuse_extract=None):
    """PatchEmbed forward.  x: (T,B,C,H,W); proj_w: (D,C,p,p); proj_b, norm_w: (D,).

    fuse_extract: True  -> patch extraction fused into the kernel (single HBM read of x)
                  False -> patches pre-extracted by XLA in bf16
                  None  -> try fused, fall back automatically if lowering fails
    """
    args = (x, proj_w, proj_b, norm_w, patch_size)
    kwargs = dict(eps=eps, out_dtype=out_dtype)
    if fuse_extract is None:
        try:
            out = _patch_embed_fused(*args, **kwargs)
            return jax.block_until_ready(out)      # surface compile/runtime errors here
        except Exception:
            return _patch_embed_prepatched(*args, **kwargs)
    if fuse_extract:
        return _patch_embed_fused(*args, **kwargs)
    return _patch_embed_prepatched(*args, **kwargs)


# ---------------------------------------------------------------------------
# Pure-JAX reference of the PyTorch forward
# ---------------------------------------------------------------------------
def _reference(x, proj_w, proj_b, norm_w, patch_size, compute_dtype=jnp.float32, eps=1e-6):
    T, B, C, H, W = x.shape
    D = proj_w.shape[0]
    p = patch_size
    Hp, Wp = H // p, W // p
    xp = x.astype(compute_dtype).reshape(T * B, C, Hp, p, Wp, p)
    xp = jnp.transpose(xp, (0, 2, 4, 1, 3, 5)).reshape(T * B, Hp * Wp, C * p * p)
    w = proj_w.reshape(D, -1).T.astype(compute_dtype)
    y = jnp.dot(xp, w, preferred_element_type=jnp.float32)
    y = y + proj_b.astype(jnp.float32)
    ms = jnp.mean(y * y, axis=-1, keepdims=True)
    y = y * jax.lax.rsqrt(ms + eps) * norm_w.astype(jnp.float32)
    return y.reshape(T, B, Hp * Wp, D)


if __name__ == "__main__":
    # Small shapes consistent with the module forward: x is (T, B, C, H, W).
    T, B, C, H, W = 2, 2, 4, 16, 16
    patch_size = 8
    embed_dim = 32

    key = jax.random.PRNGKey(0)
    kx, kw, kb = jax.random.split(key, 3)

    x = jax.random.normal(kx, (T, B, C, H, W), dtype=jnp.float32)
    fan_in = C * patch_size * patch_size
    proj_w = jax.random.normal(kw, (embed_dim, C, patch_size, patch_size),
                               dtype=jnp.float32) * (2.0 / fan_in) ** 0.5
    proj_b = jax.random.normal(kb, (embed_dim,), dtype=jnp.float32) * 0.01
    norm_w = jnp.ones((embed_dim,), dtype=jnp.float32)

    N = (H // patch_size) * (W // patch_size)
    ref_bf16 = _reference(x, proj_w, proj_b, norm_w, patch_size,
                          compute_dtype=jnp.bfloat16)
    ref_f32 = _reference(x, proj_w, proj_b, norm_w, patch_size)

    def _run(fuse):
        out = patch_embed(x, proj_w, proj_b, norm_w, patch_size, fuse_extract=fuse)
        out = jax.block_until_ready(out)
        ok = (
            out.shape == (T, B, N, embed_dim)
            and bool(jnp.allclose(out, ref_bf16, atol=2e-3, rtol=2e-3))
            and bool(jnp.allclose(out, ref_f32, atol=5e-2, rtol=5e-2))
        )
        return out, ok

    out, ok = _run(None)           # auto: fused extraction first, falls back on failure
    if not ok:
        out, ok = _run(False)      # force the pre-extracted-patches path
    assert ok, ("PatchEmbed Pallas kernel mismatch vs reference; max abs err = "
                f"{float(jnp.max(jnp.abs(out - ref_f32)))}")
    print("KERNEL_OK")
</pallas_src>

<mosaic_0001>
module attributes {stable_mosaic.version = 11 : i64} {
  func.func @_fused_patch_kernel(%arg0: i32, %arg1: i32, %arg2: memref<4x4x1x8x16xf32, #tpu.memory_space<vmem>>, %arg3: memref<256x32xbf16, #tpu.memory_space<vmem>>, %arg4: memref<2x32xf32, #tpu.memory_space<vmem>>, %arg5: memref<4x1x2x32xf32, #tpu.memory_space<vmem>>) attributes {dimension_semantics = [#tpu.dimension_semantics<parallel>, #tpu.dimension_semantics<parallel>], iteration_bounds = array<i64: 1, 2>, scalar_prefetch = 0 : i64, scratch_operands = 0 : i64, tpu.core_type = #tpu.core_type<tc>, window_params = [{transform_indices = @transform_0, window_bounds = array<i64: 4, 4, 1, 8, 16>}, {pipeline_mode = #tpu.pipeline_mode<synchronous>, transform_indices = @transform_1, window_bounds = array<i64: 256, 32>}, {pipeline_mode = #tpu.pipeline_mode<synchronous>, transform_indices = @transform_2, window_bounds = array<i64: 2, 32>}, {transform_indices = @transform_3, window_bounds = array<i64: 4, 1, 2, 32>}]} {
    %c0 = arith.constant 0 : index
    %c0_0 = arith.constant 0 : index
    %c0_1 = arith.constant 0 : index
    %c0_2 = arith.constant 0 : index
    %c0_3 = arith.constant 0 : index
    %0 = vector.load %arg2[%c0, %c0_0, %c0_1, %c0_2, %c0_3] : memref<4x4x1x8x16xf32, #tpu.memory_space<vmem>>, vector<4x4x1x8x16xf32>
    %1 = vector.shape_cast %0 : vector<4x4x1x8x16xf32> to vector<4x32x16xf32>
    %2 = tpu.transpose %1, [0, 2, 1] : vector<4x32x16xf32> -> vector<4x16x32xf32>
    %3 = vector.shape_cast %2 : vector<4x16x32xf32> to vector<8x256xf32>
    %4 = arith.truncf %3 : vector<8x256xf32> to vector<8x256xbf16>
    %c0_4 = arith.constant 0 : index
    %c0_5 = arith.constant 0 : index
    %5 = vector.load %arg3[%c0_4, %c0_5] : memref<256x32xbf16, #tpu.memory_space<vmem>>, vector<256x32xbf16>
    %cst = arith.constant dense<0.000000e+00> : vector<8x32xf32>
    %6 = tpu.matmul %4, %5, %cst {dimension_numbers = #tpu.dot_dimension_numbers<[1], [0], [0], [1], [0, 0, 1, 1], [], []>} : vector<8x256xbf16>, vector<256x32xbf16>, vector<8x32xf32> -> vector<8x32xf32>
    %c0_6 = arith.constant 0 : index
    %c0_7 = arith.constant 0 : index
    %7 = vector.load %arg4[%c0_6, %c0_7] : memref<2x32xf32, #tpu.memory_space<vmem>>, vector<2x32xf32>
    %8 = vector.extract_strided_slice %7 {offsets = [0, 0], sizes = [1, 32], strides = [1, 1]} : vector<2x32xf32> to vector<1x32xf32>
    %9 = vector.broadcast %8 : vector<1x32xf32> to vector<8x32xf32>
    %10 = arith.addf %6, %9 : vector<8x32xf32>
    %11 = arith.mulf %10, %10 : vector<8x32xf32>
    %cst_8 = arith.constant dense<0.000000e+00> : vector<8xf32>
    %12 = vector.multi_reduction <add>, %11, %cst_8 [1] : vector<8x32xf32> to vector<8xf32>
    %13 = vector.shape_cast %12 : vector<8xf32> to vector<8x1xf32>
    %cst_9 = arith.constant 3.200000e+01 : f32
    %14 = vector.broadcast %cst_9 : f32 to vector<8x1xf32>
    %15 = arith.divf %13, %14 : vector<8x1xf32>
    %cst_10 = arith.constant 9.99999997E-7 : f32
    %16 = vector.broadcast %cst_10 : f32 to vector<8x1xf32>
    %17 = arith.addf %15, %16 : vector<8x1xf32>
    %18 = math.rsqrt %17 : vector<8x1xf32>
    %19 = vector.broadcast %18 : vector<8x1xf32> to vector<8x32xf32>
    %20 = arith.mulf %10, %19 : vector<8x32xf32>
    %21 = vector.extract_strided_slice %7 {offsets = [1, 0], sizes = [1, 32], strides = [1, 1]} : vector<2x32xf32> to vector<1x32xf32>
    %22 = vector.broadcast %21 : vector<1x32xf32> to vector<8x32xf32>
    %23 = arith.mulf %20, %22 : vector<8x32xf32>
    %24 = vector.shape_cast %23 : vector<8x32xf32> to vector<4x1x2x32xf32>
    %c0_11 = arith.constant 0 : index
    %c0_12 = arith.constant 0 : index
    %c0_13 = arith.constant 0 : index
    %c0_14 = arith.constant 0 : index
    %25 = vector.load %arg5[%c0_11, %c0_12, %c0_13, %c0_14] : memref<4x1x2x32xf32, #tpu.memory_space<vmem>>, vector<4x1x2x32xf32>
    tpu.vector_store %arg5[%c0_11, %c0_12, %c0_13, %c0_14], %24 {strides = array<i32>} : memref<4x1x2x32xf32, #tpu.memory_space<vmem>>, vector<4x1x2x32xf32>,
    return
  }
  func.func @transform_0(%arg0: i32, %arg1: i32) -> (i32, i32, i32, i32, i32) {
    %c0_i32 = arith.constant 0 : i32
    %c0_i32_0 = arith.constant 0 : i32
    %c0_i32_1 = arith.constant 0 : i32
    %c0_i32_2 = arith.constant 0 : i32
    return %arg0, %c0_i32, %arg1, %c0_i32_0, %c0_i32_1 : i32, i32, i32, i32, i32
  }
  func.func @transform_1(%arg0: i32, %arg1: i32) -> (i32, i32) {
    %c0_i32 = arith.constant 0 : i32
    %c0_i32_0 = arith.constant 0 : i32
    %c0_i32_1 = arith.constant 0 : i32
    return %c0_i32, %c0_i32_0 : i32, i32
  }
  func.func @transform_2(%arg0: i32, %arg1: i32) -> (i32, i32) {
    %c0_i32 = arith.constant 0 : i32
    %c0_i32_0 = arith.constant 0 : i32
    %c0_i32_1 = arith.constant 0 : i32
    return %c0_i32, %c0_i32_0 : i32, i32
  }
  func.func @transform_3(%arg0: i32, %arg1: i32) -> (i32, i32, i32, i32) {
    %c0_i32 = arith.constant 0 : i32
    %c0_i32_0 = arith.constant 0 : i32
    %c0_i32_1 = arith.constant 0 : i32
    return %arg0, %arg1, %c0_i32, %c0_i32_0 : i32, i32, i32, i32
  }
}

module attributes {stable_mosaic.version = 11 : i64} {
  func.func @_prepatched_kernel(%arg0: i32, %arg1: memref<8x256xbf16, #tpu.memory_space<vmem>>, %arg2: memref<256x32xbf16, #tpu.memory_space<vmem>>, %arg3: memref<2x32xf32, #tpu.memory_space<vmem>>, %arg4: memref<8x32xf32, #tpu.memory_space<vmem>>) attributes {dimension_semantics = [#tpu.dimension_semantics<parallel>], iteration_bounds = array<i64: 2>, scalar_prefetch = 0 : i64, scratch_operands = 0 : i64, tpu.core_type = #tpu.core_type<tc>, window_params = [{transform_indices = @transform_0, window_bounds = array<i64: 8, 256>}, {pipeline_mode = #tpu.pipeline_mode<synchronous>, transform_indices = @transform_1, window_bounds = array<i64: 256, 32>}, {pipeline_mode = #tpu.pipeline_mode<synchronous>, transform_indices = @transform_2, window_bounds = array<i64: 2, 32>}, {transform_indices = @transform_3, window_bounds = array<i64: 8, 32>}]} {
    %c0 = arith.constant 0 : index
    %c0_0 = arith.constant 0 : index
    %0 = vector.load %arg1[%c0, %c0_0] : memref<8x256xbf16, #tpu.memory_space<vmem>>, vector<8x256xbf16>
    %c0_1 = arith.constant 0 : index
    %c0_2 = arith.constant 0 : index
    %1 = vector.load %arg2[%c0_1, %c0_2] : memref<256x32xbf16, #tpu.memory_space<vmem>>, vector<256x32xbf16>
    %cst = arith.constant dense<0.000000e+00> : vector<8x32xf32>
    %2 = tpu.matmul %0, %1, %cst {dimension_numbers = #tpu.dot_dimension_numbers<[1], [0], [0], [1], [0, 0, 1, 1], [], []>} : vector<8x256xbf16>, vector<256x32xbf16>, vector<8x32xf32> -> vector<8x32xf32>
    %c0_3 = arith.constant 0 : index
    %c0_4 = arith.constant 0 : index
    %3 = vector.load %arg3[%c0_3, %c0_4] : memref<2x32xf32, #tpu.memory_space<vmem>>, vector<2x32xf32>
    %4 = vector.extract_strided_slice %3 {offsets = [0, 0], sizes = [1, 32], strides = [1, 1]} : vector<2x32xf32> to vector<1x32xf32>
    %5 = vector.broadcast %4 : vector<1x32xf32> to vector<8x32xf32>
    %6 = arith.addf %2, %5 : vector<8x32xf32>
    %7 = arith.mulf %6, %6 : vector<8x32xf32>
    %cst_5 = arith.constant dense<0.000000e+00> : vector<8xf32>
    %8 = vector.multi_reduction <add>, %7, %cst_5 [1] : vector<8x32xf32> to vector<8xf32>
    %9 = vector.shape_cast %8 : vector<8xf32> to vector<8x1xf32>
    %cst_6 = arith.constant 3.200000e+01 : f32
    %10 = vector.broadcast %cst_6 : f32 to vector<8x1xf32>
    %11 = arith.divf %9, %10 : vector<8x1xf32>
    %cst_7 = arith.constant 9.99999997E-7 : f32
    %12 = vector.broadcast %cst_7 : f32 to vector<8x1xf32>
    %13 = arith.addf %11, %12 : vector<8x1xf32>
    %14 = math.rsqrt %13 : vector<8x1xf32>
    %15 = vector.broadcast %14 : vector<8x1xf32> to vector<8x32xf32>
    %16 = arith.mulf %6, %15 : vector<8x32xf32>
    %17 = vector.extract_strided_slice %3 {offsets = [1, 0], sizes = [1, 32], strides = [1, 1]} : vector<2x32xf32> to vector<1x32xf32>
    %18 = vector.broadcast %17 : vector<1x32xf32> to vector<8x32xf32>
    %19 = arith.mulf %16, %18 : vector<8x32xf32>
    %c0_8 = arith.constant 0 : index
    %c0_9 = arith.constant 0 : index
    %20 = vector.load %arg4[%c0_8, %c0_9] : memref<8x32xf32, #tpu.memory_space<vmem>>, vector<8x32xf32>
    tpu.vector_store %arg4[%c0_8, %c0_9], %19 {strides = array<i32>} : memref<8x32xf32, #tpu.memory_space<vmem>>, vector<8x32xf32>,
    return
  }
  func.func @transform_0(%arg0: i32) -> (i32, i32) {
    %c0_i32 = arith.constant 0 : i32
    %c0_i32_0 = arith.constant 0 : i32
    return %arg0, %c0_i32 : i32, i32
  }
  func.func @transform_1(%arg0: i32) -> (i32, i32) {
    %c0_i32 = arith.constant 0 : i32
    %c0_i32_0 = arith.constant 0 : i32
    %c0_i32_1 = arith.constant 0 : i32
    return %c0_i32, %c0_i32_0 : i32, i32
  }
  func.func @transform_2(%arg0: i32) -> (i32, i32) {
    %c0_i32 = arith.constant 0 : i32
    %c0_i32_0 = arith.constant 0 : i32
    %c0_i32_1 = arith.constant 0 : i32
    return %c0_i32, %c0_i32_0 : i32, i32
  }
  func.func @transform_3(%arg0: i32) -> (i32, i32) {
    %c0_i32 = arith.constant 0 : i32
    %c0_i32_0 = arith.constant 0 : i32
    return %arg0, %c0_i32 : i32, i32
  }
}

</mosaic_0001>

<llo_original>
// kernel: tpu_custom_call.1
$region0: #{tpu_custom_call.1}
  #allocation0 [shape = 'u32[]', space=smem, size = 0x4, offset = 0x4, fixed_abs, tag = 'smem constant byte address 0x4 - core index']
  #allocation1 [shape = 'u32[72,128]{1,0:T(1,128)}', space=vmem, size = 0x9000, scoped, tag = 'internal scratch']
  %s0 = inlined_call_operand.vmem [shape: bf16[16,256], index: 0, kind: input, shape index: {}]
  %s1 = inlined_call_operand.vmem [shape: bf16[256,32], index: 1, kind: input, shape index: {}]
  %s2 = inlined_call_operand.vmem [shape: f32[2,32], index: 2, kind: input, shape index: {}]
  %s3 = inlined_call_operand.hbm [shape: f32[16,32], index: 3, kind: output, shape index: {}]
  %s4 = sld [smem:[#allocation0]]
  $region45: #{tpu_custom_call.1} parent=0
    _
  %s6 = ssub.s32 1, %s4
  %s7 = scalar_select 0, %s6, %s4
  $region1: #{tpu_custom_call.1} parent=0
    #allocation2 [shape = 'u8[8192]{0}', space=vmem, size = 0x2000, scoped, tag = 'output window, operand 0']
    #allocation3 [shape = 's32[2]{0}', space=sflag, size = 0x8, scoped, tag = 'scoped memory for tpu_custom_call.1']
    %8 = vsyncpa [#allocation3], 0
    %s9 = scalar_lea.sflag [#allocation3], 1
    %10 = vsyncpa %s9, 0
    loop: start=0, step=1, limit=4
    $region2: #{tpu_custom_call.1} parent=1 // loop_pre_header
      _
    $region3: #{tpu_custom_call.1} parent=1 // loop_header
      %s12 = sphi 0, %s16
      %p13 = scmp.ge.s32.totalorder %s12, 4
      %s22 = sphi 0, %s24
      %s25 = sphi 0, %s22
      %s26 = sphi 0, %s25
      %s42 = sphi 0, %s26
      %s46 = sphi 0, %s46
      %s48 = sphi 0, %s46
      %s49 = sphi 0, %s48
      %s63 = sphi 0, %s49
      %s67 = sphi 0, %s67
      %s69 = sphi 0, %s67
      %s70 = sphi 0, %s69
      %s84 = sphi 0, %s70
      %s90 = sphi 0, %s92
      %s93 = sphi 0, %s90
      %s94 = sphi 0, %s93
      %s110 = sphi 0, %s94
    $region4: #{tpu_custom_call.1} parent=1 // loop_header_branch
      %15 = sbr.rel (%p13) target = $region8
    $region5: #{tpu_custom_call.1} parent=1 // loop_body
      %s17 = ssub.s32 %s12, 1
      %s18 = ssub.s32 %s12, 2
      %s19 = sadd.s32 %s12, 1
      %s20 = ssub.s32 %s12, %s19
      %p21 = scmp.eq.s32.totalorder %s20, 0
      %s23 = sadd.s32 %s22, 1
      %s24 = scalar_select %p21, %s22, %s23
      %p27 = pneg %p21
      %p28 = scmp.eq.s32.totalorder %s12, 1
      %p29 = por %p27, %p28
      %p30 = scmp.ne.s32.totalorder %s22, %s25
      %p31 = scmp.eq.s32.totalorder %s12, 0
      %p32 = por %p30, %p31
      %p33 = scmp.ne.s32.totalorder %s22, %s25
      %p34 = scmp.eq.s32.totalorder %s17, 1
      %p35 = por %p33, %p34
      %p36 = scmp.ne.s32.totalorder %s25, %s26
      %p37 = scmp.eq.s32.totalorder %s17, 0
      %p38 = por %p36, %p37
      %p39 = scmp.ne.s32.totalorder %s25, %s26
      %p40 = scmp.eq.s32.totalorder %s18, 1
      %p41 = por %p39, %p40
      %p43 = scmp.ne.s32.totalorder %s26, %s42
      %p44 = scmp.eq.s32.totalorder %s18, 0
      %p45 = por %p43, %p44
      %s47 = sadd.s32 %s46, 1
      %p50 = scmp.eq.s32.totalorder %s12, 1
      %p51 = scmp.ne.s32.totalorder %s46, %s48
      %p52 = scmp.eq.s32.totalorder %s12, 0
      %p53 = por %p51, %p52
      %p54 = scmp.ne.s32.totalorder %s46, %s48
      %p55 = scmp.eq.s32.totalorder %s17, 1
      %p56 = por %p54, %p55
      %p57 = scmp.ne.s32.totalorder %s48, %s49
      %p58 = scmp.eq.s32.totalorder %s17, 0
      %p59 = por %p57, %p58
      %p60 = scmp.ne.s32.totalorder %s48, %s49
      %p61 = scmp.eq.s32.totalorder %s18, 1
      %p62 = por %p60, %p61
      %p64 = scmp.ne.s32.totalorder %s49, %s63
      %p65 = scmp.eq.s32.totalorder %s18, 0
      %p66 = por %p64, %p65
      %s68 = sadd.s32 %s67, 1
      %p71 = scmp.eq.s32.totalorder %s12, 1
      %p72 = scmp.ne.s32.totalorder %s67, %s69
      %p73 = scmp.eq.s32.totalorder %s12, 0
      %p74 = por %p72, %p73
      %p75 = scmp.ne.s32.totalorder %s67, %s69
      %p76 = scmp.eq.s32.totalorder %s17, 1
      %p77 = por %p75, %p76
      %p78 = scmp.ne.s32.totalorder %s69, %s70
      %p79 = scmp.eq.s32.totalorder %s17, 0
      %p80 = por %p78, %p79
      %p81 = scmp.ne.s32.totalorder %s69, %s70
      %p82 = scmp.eq.s32.totalorder %s18, 1
      %p83 = por %p81, %p82
      %p85 = scmp.ne.s32.totalorder %s70, %s84
      %p86 = scmp.eq.s32.totalorder %s18, 0
      %p87 = por %p85, %p86
      %s88 = ssub.s32 %s12, %s19
      %p89 = scmp.eq.s32.totalorder %s88, 0
      %s91 = sadd.s32 %s90, 1
      %s92 = scalar_select %p89, %s90, %s91
      %p95 = pneg %p89
      %p96 = scmp.eq.s32.totalorder %s12, 1
      %p97 = por %p95, %p96
      %p98 = scmp.ne.s32.totalorder %s90, %s93
      %p99 = scmp.eq.s32.totalorder %s12, 0
      %p100 = por %p98, %p99
      %p101 = scmp.ne.s32.totalorder %s90, %s93
      %p102 = scmp.eq.s32.totalorder %s17, 1
      %p103 = por %p101, %p102
      %p104 = scmp.ne.s32.totalorder %s93, %s94
      %p105 = scmp.eq.s32.totalorder %s17, 0
      %p106 = por %p104, %p105
      %p107 = scmp.ne.s32.totalorder %s93, %s94
      %p108 = scmp.eq.s32.totalorder %s18, 1
      %p109 = por %p107, %p108
      %p111 = scmp.ne.s32.totalorder %s94, %s110
      %p112 = scmp.eq.s32.totalorder %s18, 0
      %p113 = por %p111, %p112
      %p114 = scmp.le.s32.totalorder 1, %s12
      %p115 = scmp.lt.s32.totalorder %s12, 3
      %p116 = pnand %p114, %p115
      %p117 = pneg %p116
      // Predicated region
      $region9: #{tpu_custom_call.1} parent=5 // pred_check
        _
      $region10: #{tpu_custom_call.1} parent=5 // pred_check_branch
        %119 = sbr.rel (%p116) target = $region12
      $region11: #{tpu_custom_call.1} parent=5 // pred_region
        %s120 = ssub.s32 %s12, 1
        // Predicated region
        $region13: #{tpu_custom_call.1} parent=11 // pred_check
          %p121 = pneg %p59
        $region14: #{tpu_custom_call.1} parent=11 // pred_check_branch
          %123 = sbr.rel (%p121) target = $region16
        $region15: #{tpu_custom_call.1} parent=11 // pred_region
          _
        $region16: #{tpu_custom_call.1} parent=11 // pred_fallthru
          _
        // Predicated region
        $region17: #{tpu_custom_call.1} parent=11 // pred_check
          %p124 = pneg %p80
        $region18: #{tpu_custom_call.1} parent=11 // pred_check_branch
          %126 = sbr.rel (%p124) target = $region20
        $region19: #{tpu_custom_call.1} parent=11 // pred_region
          _
        $region20: #{tpu_custom_call.1} parent=11 // pred_fallthru
          _
      $region12: #{tpu_custom_call.1} parent=5 // pred_fallthru
        _
      %p127 = scmp.lt.s32.totalorder %s12, 2
      // Predicated region
      $region21: #{tpu_custom_call.1} parent=5 // pred_check
        %p128 = pneg %p127
      $region22: #{tpu_custom_call.1} parent=5 // pred_check_branch
        %130 = sbr.rel (%p128) target = $region24
      $region23: #{tpu_custom_call.1} parent=5 // pred_region
        // Predicated region
        $region25: #{tpu_custom_call.1} parent=23 // pred_check
          %p131 = pneg %p32
        $region26: #{tpu_custom_call.1} parent=23 // pred_check_branch
          %133 = sbr.rel (%p131) target = $region28
        $region27: #{tpu_custom_call.1} parent=23 // pred_region
          %p134 = scmp.lt.s32.totalorder %s12, 1
          %s135 = scalar_select %p134, %s12, 1
          %s136 = smul.addr %s135, 2
          %s137 = smul.addr %s136, 4
          %s138 = scalar_lea.vmem %s0, %s137
        $region28: #{tpu_custom_call.1} parent=23 // pred_fallthru
          _
      $region24: #{tpu_custom_call.1} parent=5 // pred_fallthru
        _
      %p139 = scmp.le.s32.totalorder 1, %s12
      %p140 = scmp.lt.s32.totalorder %s12, 3
      %p141 = pnand %p139, %p140
      %p142 = pneg %p141
      // Predicated region
      $region29: #{tpu_custom_call.1} parent=5 // pred_check
        _
      $region30: #{tpu_custom_call.1} parent=5 // pred_check_branch
        %144 = sbr.rel (%p141) target = $region32
      $region31: #{tpu_custom_call.1} parent=5 // pred_region
        %s145 = ssub.s32 %s12, 1
        %p146 = scmp.lt.s32.totalorder %s17, 1
        %s147 = scalar_select %p146, %s17, 1
        %s148 = smul.addr %s147, 2
        %s149 = smul.addr %s148, 4
        %s150 = scalar_lea.vmem %s0, %s149
        %p151 = pneg %p38
        %p152 = pneg %p35
        %p153 = pneg %p59
        %p154 = pneg %p56
        %p155 = pneg %p80
        %p156 = pneg %p77
        %p157 = pneg %p106
        %p158 = pneg %p103
        %s159 = sand.u32 %s93, 1
        %s160 = scalar_lea.sflag [#allocation3], %s159
        %s161 = sand.u32 %s93, 1
        %s162 = smul.addr %s161, 8
        %s163 = scalar_lea.vmem [#allocation2], %s162
        %p164 = scmp.lt.s32.totalorder %s17, 1
        %s165 = scalar_select %p164, %s17, 1
        %s166 = smul.addr %s165, 2
        %s167 = smul.addr %s166, 4
        %s168 = scalar_lea.vmem %s0, %s167
        %v169 = vld [vmem:[%s168] sm:$0xff]
        %v170 = vld [vmem:[%s1] sm:$0xf]
        %v171 = vld [vmem:[%s1 + $0x4] sm:$0xf]
        %v172 = vld [vmem:[%s1 + $0x8] sm:$0xf]
        %v173 = vld [vmem:[%s1 + $0xc] sm:$0xf]
        %v174 = vld [vmem:[%s1 + $0x10] sm:$0xf]
        %v175 = vld [vmem:[%s1 + $0x14] sm:$0xf]
        %v176 = vld [vmem:[%s1 + $0x18] sm:$0xf]
        %v177 = vld [vmem:[%s1 + $0x1c] sm:$0xf]
        %v178 = vld [vmem:[%s1 + $0x20] sm:$0xf]
        %v179 = vld [vmem:[%s1 + $0x24] sm:$0xf]
        %v180 = vld [vmem:[%s1 + $0x28] sm:$0xf]
        %v181 = vld [vmem:[%s1 + $0x2c] sm:$0xf]
        %v182 = vld [vmem:[%s1 + $0x30] sm:$0xf]
        %v183 = vld [vmem:[%s1 + $0x34] sm:$0xf]
        %v184 = vld [vmem:[%s1 + $0x38] sm:$0xf]
        %v185 = vld [vmem:[%s1 + $0x3c] sm:$0xf]
        %v186 = vld [vmem:[%s1 + $0x40] sm:$0xf]
        %v187 = vld [vmem:[%s1 + $0x44] sm:$0xf]
        %v188 = vld [vmem:[%s1 + $0x48] sm:$0xf]
        %v189 = vld [vmem:[%s1 + $0x4c] sm:$0xf]
        %v190 = vld [vmem:[%s1 + $0x50] sm:$0xf]
        %v191 = vld [vmem:[%s1 + $0x54] sm:$0xf]
        %v192 = vld [vmem:[%s1 + $0x58] sm:$0xf]
        %v193 = vld [vmem:[%s1 + $0x5c] sm:$0xf]
        %v194 = vld [vmem:[%s1 + $0x60] sm:$0xf]
        %v195 = vld [vmem:[%s1 + $0x64] sm:$0xf]
        %v196 = vld [vmem:[%s1 + $0x68] sm:$0xf]
        %v197 = vld [vmem:[%s1 + $0x6c] sm:$0xf]
        %v198 = vld [vmem:[%s1 + $0x70] sm:$0xf]
        %v199 = vld [vmem:[%s1 + $0x74] sm:$0xf]
        %v200 = vld [vmem:[%s1 + $0x78] sm:$0xf]
        %v201 = vld [vmem:[%s1 + $0x7c] sm:$0xf]
        %v202 = vld [vmem:[%s2] sm:$0x3]
        %v203 = vperm.slane %v202, 0
        %v205 = vunpack.c.l.b16 %v169
        %v206 = vunpack.c.h.b16 %v169
        %v207 = vpack.c.b16 %v205, %v205
        %v208 = vpack.c.b16 %v206, %v206
        %v243 = vunpack.c.l.b16 %v170
        %v244 = vunpack.c.l.b16 %v171
        %v245 = vunpack.c.l.b16 %v172
        %v246 = vunpack.c.l.b16 %v173
        %v247 = vunpack.c.l.b16 %v174
        %v248 = vunpack.c.l.b16 %v175
        %v249 = vunpack.c.l.b16 %v176
        %v250 = vunpack.c.l.b16 %v177
        %v251 = vunpack.c.l.b16 %v178
        %v252 = vunpack.c.l.b16 %v179
        %v253 = vunpack.c.l.b16 %v180
        %v254 = vunpack.c.l.b16 %v181
        %v255 = vunpack.c.l.b16 %v182
        %v256 = vunpack.c.l.b16 %v183
        %v257 = vunpack.c.l.b16 %v184
        %v258 = vunpack.c.l.b16 %v185
        %v259 = vunpack.c.l.b16 %v186
        %v260 = vunpack.c.l.b16 %v187
        %v261 = vunpack.c.l.b16 %v188
        %v262 = vunpack.c.l.b16 %v189
        %v263 = vunpack.c.l.b16 %v190
        %v264 = vunpack.c.l.b16 %v191
        %v265 = vunpack.c.l.b16 %v192
        %v266 = vunpack.c.l.b16 %v193
        %v267 = vunpack.c.l.b16 %v194
        %v268 = vunpack.c.l.b16 %v195
        %v269 = vunpack.c.l.b16 %v196
        %v270 = vunpack.c.l.b16 %v197
        %v271 = vunpack.c.l.b16 %v198
        %v272 = vunpack.c.l.b16 %v199
        %v273 = vunpack.c.l.b16 %v200
        %v274 = vunpack.c.l.b16 %v201
        %v275 = vpack.c.b16 %v244, %v243
        %v276 = vpack.c.b16 %v246, %v245
        %v277 = vpack.c.b16 %v248, %v247
        %v278 = vpack.c.b16 %v250, %v249
        %v279 = vpack.c.b16 %v252, %v251
        %v280 = vpack.c.b16 %v254, %v253
        %v281 = vpack.c.b16 %v256, %v255
        %v282 = vpack.c.b16 %v258, %v257
        %v283 = vpack.c.b16 %v260, %v259
        %v284 = vpack.c.b16 %v262, %v261
        %v285 = vpack.c.b16 %v264, %v263
        %v286 = vpack.c.b16 %v266, %v265
        %v287 = vpack.c.b16 %v268, %v267
        %v288 = vpack.c.b16 %v270, %v269
        %v289 = vpack.c.b16 %v272, %v271
        %v290 = vpack.c.b16 %v274, %v273
        %307 = vmatpush.bf16.msra.mxu0 %v282
        %308 = vmatpush.bf16.msra.mxu0 %v281
        %309 = vmatpush.bf16.msra.mxu0 %v280
        %310 = vmatpush.bf16.msra.mxu0 %v279
        %311 = vmatpush.bf16.msra.mxu0 %v278
        %312 = vmatpush.bf16.msra.mxu0 %v277
        %313 = vmatpush.bf16.msra.mxu0 %v276
        %314 = vmatpush.bf16.msra.mxu0 %v275
        %315 = vmatmul.bf16.gmra.mxu0 %v207
        %v316 = vpop.f32.mrf.mxu0
        %v317 = vadd.f32 %v203, %v316
        %v318 = vpop.f32.mrf.mxu0
        %319 = vdwg.mxu0
        %320 = vmatpush.bf16.msra.mxu0 %v290
        %321 = vmatpush.bf16.msra.mxu0 %v289
        %322 = vmatpush.bf16.msra.mxu0 %v288
        %323 = vmatpush.bf16.msra.mxu0 %v287
        %324 = vmatpush.bf16.msra.mxu0 %v286
        %325 = vmatpush.bf16.msra.mxu0 %v285
        %326 = vmatpush.bf16.msra.mxu0 %v284
        %327 = vmatpush.bf16.msra.mxu0 %v283
        %328 = vmatmul.bf16.gmra.mxu0 %v208
        %v329 = vpop.f32.mrf.mxu0
        %v330 = vadd.f32 %v317, %v329
        %v331 = vpop.f32.mrf.mxu0
        %332 = vdwg.mxu0
        %v333 = vmul.f32 %v330, %v330
        %vm334 = vcmask 261120
        %v335 = vsel %vm334, %v333, 0.0
        %336 = vadd.xlane.f32.xlu0 %v335
        %v337 = vpop.xlane.xlu0 %336
        %v338 = vrcp.pop 32.0
        %v339 = vmul.f32 32.0, %v338
        %v340 = vsub.f32 1.0, %v339
        %v341 = vmul.f32 %v338, %v340
        %v342 = vadd.f32 %v338, %v341
        %vm343 = vweird.f32 %v338
        %v344 = vsel %vm343, %v338, %v342
        %v345 = vmul.f32 %v337, %v344
        %v346 = vadd.f32 %v345, 1e-06
        %v347 = vrsqrt.pop %v346
        %v348 = vmul.f32 %v347, %v346
        %v349 = vmul.f32 %v348, %v347
        %v350 = vmul.f32 0.5, %v349
        %v351 = vsub.f32 1.5, %v350
        %v352 = vmul.f32 %v347, %v351
        %vm353 = vweird.f32 %v346
        %vm354 = vweird.f32 %v347
        %vm355 = vmor %vm353, %vm354
        %v356 = vsel %vm355, %v347, %v352
        %v357 = vmul.f32 %v330, %v356
        %v358 = vperm.slane %v202, 1
        %v359 = vmul.f32 %v357, %v358
        %360 = vst.msk [vmem:[%s163] sm:$0xff] %vm334, %v359
        %s361 = sand.u32 %s93, 1
        %s362 = scalar_lea.sflag [#allocation3], %s361
        %s363 = sand.u32 %s93, 1
        %s364 = smul.addr %s363, 8
        %s365 = scalar_lea.vmem [#allocation2], %s364
        // Predicated region
        $region33: #{tpu_custom_call.1} parent=31 // pred_check
          %p366 = pneg %p103
        $region34: #{tpu_custom_call.1} parent=31 // pred_check_branch
          %368 = sbr.rel (%p366) target = $region36
        $region35: #{tpu_custom_call.1} parent=31 // pred_region
          %370 = vsyncadd %s362, 0
          %s371 = smul.addr %s17, 8
          %s372 = scalar_lea.hbm %s3, %s371
          %s374 = sshll.u32 %s365, 4
          %s375 = int_to_ptr.vmem [resolvable:$true] %s374
          %s376 = sshll.u32 %s372, 4
          %s377 = int_to_ptr.hbm [resolvable:$true] %s376
          %379 = dma.vmem_to_hbm [thread:$0]  %s375, 128, %s377, %s362
        $region36: #{tpu_custom_call.1} parent=31 // pred_fallthru
          _
      $region32: #{tpu_custom_call.1} parent=5 // pred_fallthru
        _
      %p380 = scmp.le.s32.totalorder 2, %s12
      // Predicated region
      $region37: #{tpu_custom_call.1} parent=5 // pred_check
        %p381 = pneg %p380
      $region38: #{tpu_custom_call.1} parent=5 // pred_check_branch
        %383 = sbr.rel (%p381) target = $region40
      $region39: #{tpu_custom_call.1} parent=5 // pred_region
        %s384 = ssub.s32 %s12, 2
        // Predicated region
        $region41: #{tpu_custom_call.1} parent=39 // pred_check
          %p385 = pneg %p109
        $region42: #{tpu_custom_call.1} parent=39 // pred_check_branch
          %387 = sbr.rel (%p385) target = $region44
        $region43: #{tpu_custom_call.1} parent=39 // pred_region
          %s388 = sand.u32 %s94, 1
          %s389 = scalar_lea.sflag [#allocation3], %s388
          %s390 = sand.u32 %s94, 1
          %s391 = smul.addr %s390, 8
          %s392 = scalar_lea.vmem [#allocation2], %s391
          %394 = dma.done %s389, 128
        $region44: #{tpu_custom_call.1} parent=39 // pred_fallthru
          _
      $region40: #{tpu_custom_call.1} parent=5 // pred_fallthru
        _
    $region6: #{tpu_custom_call.1} parent=1 // loop_footer
      %s16 = sadd.s32 1, %s12
    $region7: #{tpu_custom_call.1} parent=1 // loop_footer_branch
      %11 = sbr.rel target = $region3
    $region8: #{tpu_custom_call.1} parent=1 // loop_exit
      _
    %395 = vsyncpa [#allocation3], 1
    %s396 = scalar_lea.sflag [#allocation3], 1
    %397 = vsyncpa %s396, 1

</llo_original>
